<compile_context>
chip_gen: v7x
topology: tpu7x:2x2x1
jax: 0.10.0
libtpu: 0.0.40
codegen_flags: <defaults>
</compile_context>

<pallas_src>
import math

import jax
import jax.numpy as jnp
import numpy as np
from jax import lax
from jax.experimental import pallas as pl
from jax.experimental.pallas import tpu as pltpu

EPS = 1e-5   # PyTorch BatchNorm2d default eps
LANE = 128


# --------------------------------------------------------------------------
# Generation-aware sizing helpers.
# --------------------------------------------------------------------------
def _tpu_vmem_bytes():
    try:
        return int(pltpu.get_tpu_info().vmem_capacity_bytes)
    except Exception:
        return 64 << 20          # conservative (v7x per-TensorCore VMEM)


def _device_kind():
    try:
        return jax.devices()[0].device_kind.lower()
    except Exception:
        return ""


def _mxu_lane_target():
    # 2x256x256 MXU on v6e / v7x -> fold to 256 output lanes; 128 elsewhere.
    kind = _device_kind()
    return 256 if ("v6" in kind or "v7" in kind or "7x" in kind) else 128


def _num_core_splits():
    # v7x has 2 TensorCores per chip; split the mem-bound kernels across them.
    kind = _device_kind()
    return 2 if ("v7" in kind or "7x" in kind) else 1


def _tile_budget_bytes():
    # Budget for one kernel's double-buffered streaming rows; leave headroom
    # under the scoped-VMEM limit for Mosaic internal scratch.
    return max(4 << 20, int(_tpu_vmem_bytes() * 0.30))


def _vmem_limit_bytes():
    return int(min(_tpu_vmem_bytes() * 3 // 4, 100 << 20))


def _pick_tile_rows(total_rows, bytes_per_row, resident_bytes=0, budget=None):
    """Largest row tile (multiple of 8, dividing total_rows) whose
    double-buffered in+out row footprint plus resident buffers stays under
    the generation-aware VMEM budget."""
    if budget is None:
        budget = _tile_budget_bytes()
    avail = max(budget - resident_bytes, 2 * 8 * bytes_per_row)
    cap = max(8, avail // (2 * bytes_per_row))
    if total_rows <= cap:
        return total_rows
    t = min((total_rows // 8) * 8, (cap // 8) * 8)
    while t >= 8:
        if total_rows % t == 0:
            return t
        t -= 8
    # TODO(synk): pad M to a multiple of 8 instead of falling back to one
    # block when no divisor fits (possible VMEM blowup at awkward shapes).
    return total_rows


def _fold_factor(cout, m, lane_target):
    """Lane-fold factor R so R*cout output lanes ~= lane_target, R | m."""
    if lane_target % cout != 0:
        lane_target = LANE if LANE % cout == 0 else cout
    r = max(lane_target // cout, 1)
    while r > 1 and m % r != 0:
        r //= 2
    return max(r, 1)


# --------------------------------------------------------------------------
# Kernel A: per-channel sum / sum-of-squares reduction (BN1 batch stats).
# Grid = (core_split, row_tiles); stats are a per-split resident accumulator.
# --------------------------------------------------------------------------
def _channel_stats_kernel(x_ref, s_ref):
    @pl.when(pl.program_id(1) == 0)
    def _():
        s_ref[...] = jnp.zeros_like(s_ref)

    xv = x_ref[...]
    s_ref[0, 0:1, :] += jnp.sum(xv, axis=0, keepdims=True)
    s_ref[0, 1:2, :] += jnp.sum(xv * xv, axis=0, keepdims=True)


def channel_stats(xfold, r, c):
    """xfold: (M//r, r*c) row-major fold of a (M, c) tensor. Returns per-channel
    biased mean/var (length c)."""
    mr, rc = xfold.shape
    nc = _num_core_splits()
    if mr % (nc * 8) != 0:
        nc = 1
    rows = mr // nc
    resident = 2 * (2 * rc * 4)
    tm = _pick_tile_rows(rows, 4 * rc, resident)
    assert rows % tm == 0
    inner = rows // tm
    s = pl.pallas_call(
        _channel_stats_kernel,
        out_shape=jax.ShapeDtypeStruct((nc, 2, rc), jnp.float32),
        grid_spec=pltpu.PrefetchScalarGridSpec(
            num_scalar_prefetch=0,
            grid=(nc, inner),
            in_specs=[pl.BlockSpec((tm, rc), lambda cs, i: (cs * inner + i, 0))],
            out_specs=pl.BlockSpec((1, 2, rc), lambda cs, i: (cs, 0, 0)),
        ),
        compiler_params=pltpu.CompilerParams(
            dimension_semantics=("parallel", "arbitrary"),
            vmem_limit_bytes=_vmem_limit_bytes()),
    )(xfold)
    s = s.sum(axis=0).reshape(2, r, c).sum(axis=1)
    n = mr * r
    mean = s[0] / n
    var = s[1] / n - mean * mean
    return mean, var


# --------------------------------------------------------------------------
# Kernel B: fused BN(scale/shift) + ReLU + 1x1 conv (lane-folded matmul),
# with BN2 batch statistics of the output fused as a resident accumulator.
# Input  x4: (M/R, R*Cin)   weight W4 = kron(I_R, W1): (R*Cin, R*Cout) bf16
# Output y4: (M/R, R*Cout) bf16 (row-major identical to (M, Cout))
# --------------------------------------------------------------------------
def _bn_relu_conv1x1_kernel(x_ref, w_ref, scale_ref, shift_ref, y_ref, s_ref):
    # elementwise BN + ReLU in f32 (VPU), bf16 only at the MXU input
    xn = jnp.maximum(x_ref[...] * scale_ref[...] + shift_ref[...], 0.0)
    y = jnp.dot(xn.astype(jnp.bfloat16), w_ref[...],
                preferred_element_type=jnp.float32)
    y_ref[...] = y.astype(jnp.bfloat16)       # bf16 writeback (halved HBM)

    @pl.when(pl.program_id(1) == 0)
    def _():
        s_ref[...] = jnp.zeros_like(s_ref)

    # BN2 statistics from the f32 in-register result (no extra y1 HBM pass)
    s_ref[0, 0:1, :] += jnp.sum(y, axis=0, keepdims=True)
    s_ref[0, 1:2, :] += jnp.sum(y * y, axis=0, keepdims=True)


def bn_relu_conv1x1(xfold, w4_bf16, scale4, shift4):
    mr, rcin = xfold.shape
    rcout = w4_bf16.shape[1]
    nc = _num_core_splits()
    if mr % (nc * 8) != 0:
        nc = 1
    rows = mr // nc
    resident = (rcin * rcout * 2            # resident bf16 weight
                + 2 * (2 * rcin * 4)        # scale + shift
                + 2 * (2 * rcout * 4))      # stats accumulator
    tm = _pick_tile_rows(rows, 4 * rcin + 2 * rcout, resident)
    assert rows % tm == 0
    inner = rows // tm
    y4, stats = pl.pallas_call(
        _bn_relu_conv1x1_kernel,
        out_shape=(jax.ShapeDtypeStruct((mr, rcout), jnp.bfloat16),
                   jax.ShapeDtypeStruct((nc, 2, rcout), jnp.float32)),
        grid_spec=pltpu.PrefetchScalarGridSpec(
            num_scalar_prefetch=0,
            grid=(nc, inner),
            in_specs=[
                pl.BlockSpec((tm, rcin), lambda cs, i: (cs * inner + i, 0)),
                pl.BlockSpec((rcin, rcout), lambda cs, i: (0, 0)),
                pl.BlockSpec((1, rcin), lambda cs, i: (0, 0)),
                pl.BlockSpec((1, rcin), lambda cs, i: (0, 0)),
            ],
            out_specs=(pl.BlockSpec((tm, rcout),
                                    lambda cs, i: (cs * inner + i, 0)),
                       pl.BlockSpec((1, 2, rcout), lambda cs, i: (cs, 0, 0))),
        ),
        compiler_params=pltpu.CompilerParams(
            dimension_semantics=("parallel", "arbitrary"),
            vmem_limit_bytes=_vmem_limit_bytes()),
    )(xfold, w4_bf16, scale4, shift4)
    return y4, stats


# --------------------------------------------------------------------------
# Kernel C: fused BN + ReLU + 3x3 conv (padding=1).  Row-folded taps:
# activations live as (H, W*C1) rows, each tap is one (H,W*C1)@(W*C1,W*C2)
# matmul with a block-diagonal kron(I_W, w_tap) weight -> K = W*C1 deep and a
# W*C2-lane-wide output store, no in-kernel reshapes.
# --------------------------------------------------------------------------
def _make_bn_relu_conv3x3_kernel(H, W, C1, C2):
    WC1, WC2 = W * C1, W * C2
    PW = (W + 2) * C1

    def kernel(y_ref, w_ref, scale_ref, shift_ref, o_ref, xs_ref):
        # BN + ReLU in f32 (VPU), one bf16 interior-band store; the zero halo
        # is 2 row stores + 2 narrow column strips per step (per-step keeps
        # the "parallel" grid axis megacore-safe).
        # TODO(synk): fold the column strips into the interior store with an
        # in-register lane concat to drop the 2 masked stores per step.
        yn = jnp.maximum(y_ref[0].astype(jnp.float32) * scale_ref[...]
                         + shift_ref[...], 0.0)
        zrow = jnp.zeros((1, PW), jnp.bfloat16)
        zcol = jnp.zeros((H, C1), jnp.bfloat16)
        xs_ref[0:1, :] = zrow
        xs_ref[H + 1:H + 2, :] = zrow
        xs_ref[1:1 + H, 0:C1] = zcol
        xs_ref[1:1 + H, C1 + WC1:PW] = zcol
        xs_ref[1:1 + H, C1:C1 + WC1] = yn.astype(jnp.bfloat16)

        # 9 taps, each one deep matmul; f32 accumulation, one store per image.
        acc = jnp.zeros((H, WC2), jnp.float32)
        for kh in range(3):
            for kw in range(3):
                slab = xs_ref[kh:kh + H, kw * C1:kw * C1 + WC1]   # (H, W*C1)
                acc = acc + jnp.dot(slab, w_ref[kh * 3 + kw],
                                    preferred_element_type=jnp.float32)
        o_ref[0] = acc

    return kernel


def bn_relu_conv3x3(y1_rows, taps_bf16, scale2_rows, shift2_rows, H, W, C1, C2):
    N = y1_rows.shape[0]
    WC1, WC2 = W * C1, W * C2
    kernel = _make_bn_relu_conv3x3_kernel(H, W, C1, C2)
    out = pl.pallas_call(
        kernel,
        out_shape=jax.ShapeDtypeStruct((N, H, WC2), jnp.float32),
        grid_spec=pltpu.PrefetchScalarGridSpec(
            num_scalar_prefetch=0,
            grid=(N,),
            in_specs=[
                pl.BlockSpec((1, H, WC1), lambda n: (n, 0, 0)),
                pl.BlockSpec((9, WC1, WC2), lambda n: (0, 0, 0)),
                pl.BlockSpec((1, WC1), lambda n: (0, 0)),
                pl.BlockSpec((1, WC1), lambda n: (0, 0)),
            ],
            out_specs=pl.BlockSpec((1, H, WC2), lambda n: (n, 0, 0)),
            scratch_shapes=[pltpu.VMEM((H + 2, (W + 2) * C1), jnp.bfloat16)],
        ),
        compiler_params=pltpu.CompilerParams(
            dimension_semantics=("parallel",),
            vmem_limit_bytes=_vmem_limit_bytes()),
    )(y1_rows, taps_bf16, scale2_rows, shift2_rows)
    return out.reshape(N, H, W, C2)


# --------------------------------------------------------------------------
# Glue: parameters, grouped-weight expansion, forward.
# --------------------------------------------------------------------------
def grouped_weight_to_dense_hwio(w_oihw, groups):
    """torch grouped-conv weight (Cout, Cin/groups, kh, kw) -> dense block-diag
    HWIO weight (kh, kw, Cin, Cout)."""
    Cout, Cin_pg, kh, kw = w_oihw.shape
    Cin = Cin_pg * groups
    out_pg = Cout // groups
    w_hwio = jnp.zeros((kh, kw, Cin, Cout), jnp.float32)
    for g in range(groups):
        blk = jnp.transpose(w_oihw[g * out_pg:(g + 1) * out_pg], (2, 3, 1, 0))
        w_hwio = w_hwio.at[:, :, g * Cin_pg:(g + 1) * Cin_pg,
                           g * out_pg:(g + 1) * out_pg].set(blk)
    return w_hwio


def init_params(key, in_channels, growth_rate, bottleneck, group_3x3):
    c1_out = bottleneck * growth_rate
    k = jax.random.split(key, 6)
    conv1_w = (jax.random.normal(k[0], (c1_out, in_channels, 1, 1), jnp.float32)
               * math.sqrt(2.0 / in_channels))
    conv2_w = (jax.random.normal(k[1], (growth_rate, c1_out // group_3x3, 3, 3),
                                 jnp.float32)
               * math.sqrt(2.0 / (9 * (c1_out // group_3x3))))
    return {
        "conv1_w": conv1_w,
        "conv1_mask": jnp.ones_like(conv1_w),  # LearnedGroupConv mask buffer
        "conv2_w": conv2_w,
        "bn1_gamma": 1.0 + 0.1 * jax.random.normal(k[2], (in_channels,), jnp.float32),
        "bn1_beta": 0.05 * jax.random.normal(k[3], (in_channels,), jnp.float32),
        "bn2_gamma": 1.0 + 0.1 * jax.random.normal(k[4], (c1_out,), jnp.float32),
        "bn2_beta": 0.05 * jax.random.normal(k[5], (c1_out,), jnp.float32),
    }


def dense_layer_forward(x_nchw, params, group_3x3):
    x = jnp.transpose(x_nchw, (0, 2, 3, 1)).astype(jnp.float32)  # NCHW -> NHWC
    N, H, W, Cin = x.shape
    M = N * H * W
    Cout1 = params["conv1_w"].shape[0]
    C1 = Cout1
    C2 = params["conv2_w"].shape[0]

    # 1x1 lane fold: 256 output lanes on v6e/v7x, 128 on v5e and older.
    R = _fold_factor(Cout1, M, _mxu_lane_target())
    x4 = x.reshape(M // R, R * Cin)          # row-major fold: free reshape

    # ---- BN1 batch stats (Pallas reduction kernel; biased var, torch-style)
    mean1, var1 = channel_stats(x4, R, Cin)
    scale1 = params["bn1_gamma"] / jnp.sqrt(var1 + EPS)
    shift1 = params["bn1_beta"] - mean1 * scale1

    # ---- conv_1: BN + ReLU + masked 1x1 conv (lane-folded), fused y1 stats
    w1 = (params["conv1_w"] * params["conv1_mask"])[:, :, 0, 0]   # (Cout1, Cin)
    W4 = jnp.kron(jnp.eye(R, dtype=jnp.float32), w1.T).astype(jnp.bfloat16)
    scale4 = jnp.tile(scale1, R).reshape(1, R * Cin)
    shift4 = jnp.tile(shift1, R).reshape(1, R * Cin)
    y4, ystats = bn_relu_conv1x1(x4, W4, scale4, shift4)   # y4 is bf16

    # ---- BN2 batch stats came out of the 1x1 kernel (no extra y1 HBM pass)
    s = ystats.sum(axis=0).reshape(2, R, Cout1).sum(axis=1)
    mean2 = s[0] / M
    var2 = s[1] / M - mean2 * mean2
    scale2 = params["bn2_gamma"] / jnp.sqrt(var2 + EPS)
    shift2 = params["bn2_beta"] - mean2 * scale2

    # ---- conv_2: BN + ReLU + 3x3 grouped conv, padding=1 (row-folded taps)
    y1_rows = y4.reshape(N, H, W * C1)       # free row-major reshape, bf16
    w2_hwio = grouped_weight_to_dense_hwio(params["conv2_w"], group_3x3)
    eye_w = jnp.eye(W, dtype=jnp.float32)
    taps = jnp.stack([jnp.kron(eye_w, w2_hwio[kh, kw])
                      for kh in range(3) for kw in range(3)],
                     axis=0).astype(jnp.bfloat16)          # (9, W*C1, W*C2)
    scale2_rows = jnp.tile(scale2, W).reshape(1, W * C1)
    shift2_rows = jnp.tile(shift2, W).reshape(1, W * C1)
    y2 = bn_relu_conv3x3(y1_rows, taps, scale2_rows, shift2_rows, H, W, C1, C2)

    # torch.cat([x_, x], dim=1); boundary concat/transposes kept in XLA
    # (see TODO at top: fuse across layers by staying NHWC).
    out_nhwc = jnp.concatenate([x, y2], axis=-1)
    return jnp.transpose(out_nhwc, (0, 3, 1, 2))                 # back to NCHW


# --------------------------------------------------------------------------
# Pure-JAX reference (NCHW, lax conv) for verification.
# --------------------------------------------------------------------------
def reference_forward(x, params, group_3x3):
    def bn_relu(t, gamma, beta):
        m = t.mean((0, 2, 3))
        v = t.var((0, 2, 3))
        s = (gamma / jnp.sqrt(v + EPS))[None, :, None, None]
        b = beta[None, :, None, None] - m[None, :, None, None] * s
        return jnp.maximum(t * s + b, 0.0)

    xh = bn_relu(x, params["bn1_gamma"], params["bn1_beta"])
    w1 = params["conv1_w"] * params["conv1_mask"]
    y1 = lax.conv_general_dilated(xh, w1, (1, 1), "VALID",
                                  dimension_numbers=("NCHW", "OIHW", "NCHW"))
    yh = bn_relu(y1, params["bn2_gamma"], params["bn2_beta"])
    y2 = lax.conv_general_dilated(yh, params["conv2_w"], (1, 1),
                                  ((1, 1), (1, 1)),
                                  feature_group_count=group_3x3,
                                  dimension_numbers=("NCHW", "OIHW", "NCHW"))
    return jnp.concatenate([x, y2], axis=1)


if __name__ == "__main__":
    # Module hyper-parameters (small, consistent with CondenseNet conventions).
    in_channels, growth_rate = 8, 8
    bottleneck, group_1x1, group_3x3 = 4, 4, 4
    condense_factor, dropout_rate = 4, 0.0
    N, H, W = 2, 8, 8

    key = jax.random.PRNGKey(0)
    kx, kp = jax.random.split(key)
    x = jax.random.normal(kx, (N, in_channels, H, W), jnp.float32)
    params = init_params(kp, in_channels, growth_rate, bottleneck, group_3x3)

    out = dense_layer_forward(x, params, group_3x3)
    out = jax.block_until_ready(out)

    assert out.shape == (N, in_channels + growth_rate, H, W), out.shape
    ref = reference_forward(x, params, group_3x3)
    # bf16 activation storage / MXU inputs (f32 stats + accumulation) widen
    # the tolerance slightly vs. the all-f32 torch math.
    np.testing.assert_allclose(np.asarray(out), np.asarray(ref),
                               rtol=2e-2, atol=3e-2)
    print("KERNEL_OK")
</pallas_src>

<mosaic_0001>
module attributes {stable_mosaic.version = 11 : i64} {
  func.func @_channel_stats_kernel(%arg0: i32, %arg1: i32, %arg2: memref<32x32xf32, #tpu.memory_space<vmem>>, %arg3: memref<1x2x32xf32, #tpu.memory_space<vmem>>) attributes {dimension_semantics = [#tpu.dimension_semantics<parallel>, #tpu.dimension_semantics<arbitrary>], iteration_bounds = array<i64: 1, 1>, scalar_prefetch = 0 : i64, scratch_operands = 0 : i64, tpu.core_type = #tpu.core_type<tc>, window_params = [{transform_indices = @transform_0, window_bounds = array<i64: 32, 32>}, {transform_indices = @transform_1, window_bounds = array<i64: 1, 2, 32>}]} {
    %c0_i32 = arith.constant 0 : i32
    %0 = arith.cmpi eq, %arg1, %c0_i32 : i32
    %1 = arith.extui %0 : i1 to i32
    %c0_i32_0 = arith.constant 0 : i32
    %2 = arith.cmpi ne, %1, %c0_i32_0 : i32
    scf.if %2 {
      %cst_14 = arith.constant 0.000000e+00 : f32
      %21 = vector.broadcast %cst_14 : f32 to vector<1x2x32xf32>
      %c0_15 = arith.constant 0 : index
      %c0_16 = arith.constant 0 : index
      %c0_17 = arith.constant 0 : index
      %22 = vector.load %arg3[%c0_15, %c0_16, %c0_17] : memref<1x2x32xf32, #tpu.memory_space<vmem>>, vector<1x2x32xf32>
      tpu.vector_store %arg3[%c0_15, %c0_16, %c0_17], %21 {strides = array<i32>} : memref<1x2x32xf32, #tpu.memory_space<vmem>>, vector<1x2x32xf32>,
    } else {
    }
    %c0 = arith.constant 0 : index
    %c0_1 = arith.constant 0 : index
    %3 = vector.load %arg2[%c0, %c0_1] : memref<32x32xf32, #tpu.memory_space<vmem>>, vector<32x32xf32>
    %c0_2 = arith.constant 0 : index
    %c0_3 = arith.constant 0 : index
    %c0_4 = arith.constant 0 : index
    %4 = vector.load %arg3[%c0_2, %c0_3, %c0_4] : memref<1x2x32xf32, #tpu.memory_space<vmem>>, vector<1x1x32xf32>
    %5 = vector.shape_cast %4 : vector<1x1x32xf32> to vector<1x32xf32>
    %cst = arith.constant dense<0.000000e+00> : vector<32xf32>
    %6 = vector.multi_reduction <add>, %3, %cst [0] : vector<32x32xf32> to vector<32xf32>
    %7 = vector.shape_cast %6 : vector<32xf32> to vector<1x32xf32>
    %8 = arith.addf %5, %7 : vector<1x32xf32>
    %c0_5 = arith.constant 0 : index
    %c0_6 = arith.constant 0 : index
    %c0_7 = arith.constant 0 : index
    %9 = vector.load %arg3[%c0_5, %c0_6, %c0_7] : memref<1x2x32xf32, #tpu.memory_space<vmem>>, vector<1x1x32xf32>
    %10 = vector.shape_cast %9 : vector<1x1x32xf32> to vector<1x32xf32>
    %11 = vector.shape_cast %8 : vector<1x32xf32> to vector<1x1x32xf32>
    tpu.vector_store %arg3[%c0_5, %c0_6, %c0_7], %11 {strides = array<i32>} : memref<1x2x32xf32, #tpu.memory_space<vmem>>, vector<1x1x32xf32>,
    %c0_8 = arith.constant 0 : index
    %c1 = arith.constant 1 : index
    %c0_9 = arith.constant 0 : index
    %12 = vector.load %arg3[%c0_8, %c1, %c0_9] : memref<1x2x32xf32, #tpu.memory_space<vmem>>, vector<1x1x32xf32>
    %13 = vector.shape_cast %12 : vector<1x1x32xf32> to vector<1x32xf32>
    %14 = arith.mulf %3, %3 : vector<32x32xf32>
    %cst_10 = arith.constant dense<0.000000e+00> : vector<32xf32>
    %15 = vector.multi_reduction <add>, %14, %cst_10 [0] : vector<32x32xf32> to vector<32xf32>
    %16 = vector.shape_cast %15 : vector<32xf32> to vector<1x32xf32>
    %17 = arith.addf %13, %16 : vector<1x32xf32>
    %c0_11 = arith.constant 0 : index
    %c1_12 = arith.constant 1 : index
    %c0_13 = arith.constant 0 : index
    %18 = vector.load %arg3[%c0_11, %c1_12, %c0_13] : memref<1x2x32xf32, #tpu.memory_space<vmem>>, vector<1x1x32xf32>
    %19 = vector.shape_cast %18 : vector<1x1x32xf32> to vector<1x32xf32>
    %20 = vector.shape_cast %17 : vector<1x32xf32> to vector<1x1x32xf32>
    tpu.vector_store %arg3[%c0_11, %c1_12, %c0_13], %20 {strides = array<i32>} : memref<1x2x32xf32, #tpu.memory_space<vmem>>, vector<1x1x32xf32>,
    return
  }
  func.func @transform_0(%arg0: i32, %arg1: i32) -> (i32, i32) {
    %c1_i32 = arith.constant 1 : i32
    %0 = arith.muli %arg0, %c1_i32 : i32
    %1 = arith.addi %0, %arg1 : i32
    %c0_i32 = arith.constant 0 : i32
    %c0_i32_0 = arith.constant 0 : i32
    return %1, %c0_i32 : i32, i32
  }
  func.func @transform_1(%arg0: i32, %arg1: i32) -> (i32, i32, i32) {
    %c0_i32 = arith.constant 0 : i32
    %c0_i32_0 = arith.constant 0 : i32
    %c0_i32_1 = arith.constant 0 : i32
    return %arg0, %c0_i32, %c0_i32_0 : i32, i32, i32
  }
}

</mosaic_0001>

<llo_original>
// kernel: tpu_custom_call.1
$region0: #{tpu_custom_call.1}
  #allocation0 [shape = 'u32[]', space=smem, size = 0x4, offset = 0x4, fixed_abs, tag = 'smem constant byte address 0x4 - core index']
  #allocation1 [shape = 'u32[144,128]{1,0:T(1,128)}', space=vmem, size = 0x12000, scoped, tag = 'internal scratch']
  %s0 = inlined_call_operand.hbm [shape: f32[32,32], index: 0, kind: input, shape index: {}]
  %s1 = inlined_call_operand.hbm [shape: f32[1,2,32], index: 1, kind: output, shape index: {}]
  %s2 = sld [smem:[#allocation0]]
  $region22: #{tpu_custom_call.1} parent=0
    _
  %s4 = ssub.s32 1, %s2
  %s5 = scalar_select 0, %s4, %s2
  $region1: #{tpu_custom_call.1} parent=0
    #allocation2 [shape = 'u8[16384]{0}', space=vmem, size = 0x4000, scoped, tag = 'input window, operand 0, single buffered']
    #allocation3 [shape = 's32[1]{0}', space=sflag, size = 0x4, scoped, tag = 'scoped memory for tpu_custom_call.1']
    #allocation4 [shape = 's32[1]{0}', space=sflag, size = 0x4, scoped, tag = 'scoped memory for tpu_custom_call.1']
    #allocation5 [shape = 'u8[1024]{0}', space=vmem, size = 0x400, scoped, tag = 'output window, operand 0, single buffered']
    %6 = vsyncpa [#allocation3], 0
    %7 = vsyncpa [#allocation4], 0
    // Predicated region
    $region2: #{tpu_custom_call.1} parent=1 // pred_check
      _
    $region3: #{tpu_custom_call.1} parent=1 // pred_check_branch
      %9 = sbr.rel (0) target = $region5
    $region4: #{tpu_custom_call.1} parent=1 // pred_region
      %s10 = sadd.s32 0, 0
      %s11 = smul.u32 4, %s10
      %s13 = ssub.s32 512, 512
      %14 = vsyncadd [#allocation3], %s13
      %s15 = smul.addr %s11, 128
      %s16 = scalar_lea.hbm %s0, %s15
      %s17 = sshll.u32 [#allocation2], 4
      %s18 = int_to_ptr.vmem [resolvable:$true] %s17
      %23 = dma.hbm_to_vmem [thread:$0]  %s16, 512, %s18, [#allocation3], 128, 128, 8
    $region5: #{tpu_custom_call.1} parent=1 // pred_fallthru
      _
    // Predicated region
    $region6: #{tpu_custom_call.1} parent=1 // pred_check
      _
    $region7: #{tpu_custom_call.1} parent=1 // pred_check_branch
      %25 = sbr.rel (0) target = $region9
    $region8: #{tpu_custom_call.1} parent=1 // pred_region
      %26 = dma.done [#allocation3], 512
    $region9: #{tpu_custom_call.1} parent=1 // pred_fallthru
      _
    %s27 = sadd.s32 0, 0
    %s28 = smul.u32 4, %s27
    %p29 = scmp.eq.s32.totalorder 0, 0
    // Predicated region
    $region10: #{tpu_custom_call.1} parent=1 // pred_check
      %p30 = pneg %p29
    $region11: #{tpu_custom_call.1} parent=1 // pred_check_branch
      %32 = sbr.rel (%p30) target = $region13
    $region12: #{tpu_custom_call.1} parent=1 // pred_region
      %vm33 = vcmask 254976
      %34 = vst.msk [vmem:[#allocation5] sm:$0x3] %vm33, 0.0
    $region13: #{tpu_custom_call.1} parent=1 // pred_fallthru
      _
    %v35 = vld [vmem:[#allocation2] sm:$0xff]
    %v36 = vld [vmem:[#allocation2 + $0x8] sm:$0xff]
    %v37 = vld [vmem:[#allocation2 + $0x10] sm:$0xff]
    %v38 = vld [vmem:[#allocation2 + $0x18] sm:$0xff]
    %v39 = vld [vmem:[#allocation5] sm:$0x1]
    %vm40 = vcmask 261120
    %v41 = vsel %vm40, %v35, 0.0
    %v42 = vsel %vm40, %v36, 0.0
    %v43 = vadd.f32 %v41, %v42
    %v44 = vsel %vm40, %v37, 0.0
    %v45 = vadd.f32 %v43, %v44
    %v46 = vsel %vm40, %v38, 0.0
    %v47 = vadd.f32 %v45, %v46
    %v48 = vrot.slane %v47, 4
    %v49 = vadd.f32 %v47, %v48
    %v50 = vrot.slane %v49, 2
    %v51 = vadd.f32 %v49, %v50
    %v52 = vrot.slane %v51, 1
    %v53 = vadd.f32 %v51, %v52
    %v54 = vadd.f32 %v39, %v53
    %vm55 = vcmask 253952
    %56 = vst.msk [vmem:[#allocation5] sm:$0x1] %vm55, %v54
    %v57 = vld [vmem:[#allocation5 + $0x1] sm:$0x1]
    %v58 = vmul.f32 %v35, %v35
    %v59 = vmul.f32 %v36, %v36
    %v60 = vmul.f32 %v37, %v37
    %v61 = vmul.f32 %v38, %v38
    %v62 = vsel %vm40, %v58, 0.0
    %v63 = vsel %vm40, %v59, 0.0
    %v64 = vadd.f32 %v62, %v63
    %v65 = vsel %vm40, %v60, 0.0
    %v66 = vadd.f32 %v64, %v65
    %v67 = vsel %vm40, %v61, 0.0
    %v68 = vadd.f32 %v66, %v67
    %v69 = vrot.slane %v68, 4
    %v70 = vadd.f32 %v68, %v69
    %v71 = vrot.slane %v70, 2
    %v72 = vadd.f32 %v70, %v71
    %v73 = vrot.slane %v72, 1
    %v74 = vadd.f32 %v72, %v73
    %v75 = vadd.f32 %v57, %v74
    %76 = vst.msk [vmem:[#allocation5 + $0x1] sm:$0x1] %vm55, %v75
    // Predicated region
    $region14: #{tpu_custom_call.1} parent=1 // pred_check
      _
    $region15: #{tpu_custom_call.1} parent=1 // pred_check_branch
      %78 = sbr.rel (0) target = $region17
    $region16: #{tpu_custom_call.1} parent=1 // pred_region
      %s80 = ssub.s32 32, 32
      %81 = vsyncadd [#allocation4], %s80
      %s83 = sshll.u32 [#allocation5], 4
      %s84 = int_to_ptr.vmem [resolvable:$true] %s83
      %86 = dma.vmem_to_hbm [thread:$0]  %s84, 32, %s1, [#allocation4]
    $region17: #{tpu_custom_call.1} parent=1 // pred_fallthru
      _
    // Predicated region
    $region18: #{tpu_custom_call.1} parent=1 // pred_check
      _
    $region19: #{tpu_custom_call.1} parent=1 // pred_check_branch
      %88 = sbr.rel (0) target = $region21
    $region20: #{tpu_custom_call.1} parent=1 // pred_region
      %89 = dma.done [#allocation4], 32
    $region21: #{tpu_custom_call.1} parent=1 // pred_fallthru
      _
    %90 = vsyncpa [#allocation3], 1
    %91 = vsyncpa [#allocation4], 1

</llo_original>
